<compile_context>
chip_gen: v6e
topology: v6e:2x2x1
jax: 0.10.0
libtpu: 0.0.40
codegen_flags: <defaults>
</compile_context>

<pallas_src>
import functools

import jax
import jax.numpy as jnp
from jax.experimental import pallas as pl
from jax.experimental.pallas import tpu as pltpu


def _softplus(x):
    # Numerically stable softplus, elementwise (VPU + EUP ops only).
    return jnp.maximum(x, 0.0) + jnp.log1p(jnp.exp(-jnp.abs(x)))


def _pick_batch_tile(batch: int) -> int:
    for tb in (256, 128, 64, 32, 16, 8):
        if batch % tb == 0:
            return tb
    return batch  # block == full dim, always legal


def _round_up_lanes(n: int) -> int:
    return 128 * pl.cdiv(n, 128)


# ----------------------------------------------------------------------------
# Regression path: mean / aleatoric_var / epistemic_var (packed output slab)
# ----------------------------------------------------------------------------
def _regression_kernel(x_ref, w_ref, b_ref, out_ref,
                       *, n_models: int, mc_samples: int,
                       out_dim: int, pad: int):
    two_d = 2 * out_dim
    # One fused MXU call: [TB, H] @ [H, E*2D]  (+ bias broadcast over rows).
    out = jnp.dot(x_ref[...], w_ref[...],
                  preferred_element_type=jnp.float32) + b_ref[...]

    # Per-member static slices of the fused result (E is a compile-time int).
    means = []
    sum_m = None
    sum_v = None
    for e in range(n_models):
        chunk = out[:, e * two_d:(e + 1) * two_d]
        m = chunk[:, :out_dim]                 # criterion.mean(out)
        v = _softplus(chunk[:, out_dim:])      # criterion.var(out)
        means.append(m)
        sum_m = m if sum_m is None else sum_m + m
        sum_v = v if sum_v is None else sum_v + v

    inv_e = 1.0 / float(n_models)              # static -> constant-folded
    mean = sum_m * inv_e
    alea = sum_v * inv_e

    # Unbiased variance over the E*mc (repeated) samples, two-pass/centered.
    total = n_models * mc_samples
    denom = float(total - 1) if total > 1 else 1.0  # torch.var(N=1) is NaN anyway
    sq = None
    for m in means:
        d = m - mean
        sq = d * d if sq is None else sq + d * d
    epi = sq * (float(mc_samples) / denom)

    packed = jnp.concatenate([mean, alea, epi], axis=-1)
    if pad > 0:
        packed = jnp.concatenate(
            [packed, jnp.zeros((packed.shape[0], pad), jnp.float32)], axis=-1)
    out_ref[...] = packed


def regression_forward(x, w, b, *, monte_carlo_samples: int,
                       compute_dtype=jnp.float32):
    """x: [B, H]; w: [E, H, 2D]; b: [E, 2D] -> dict(mean, aleatoric_var, epistemic_var)."""
    B, H = x.shape
    E, _, two_d = w.shape
    D = two_d // 2

    # Fuse the ensemble into the matmul N dimension (host-side, cheap).
    w_fused = jnp.transpose(w, (1, 0, 2)).reshape(H, E * two_d)
    b_fused = b.reshape(1, E * two_d).astype(jnp.float32)
    x_c = x.astype(compute_dtype)
    w_c = w_fused.astype(compute_dtype)

    P = _round_up_lanes(3 * D)                 # lane-dense packed output width
    tb = _pick_batch_tile(B)
    nb = B // tb

    kernel = functools.partial(_regression_kernel,
                               n_models=E, mc_samples=monte_carlo_samples,
                               out_dim=D, pad=P - 3 * D)

    slab = pl.pallas_call(
        kernel,
        out_shape=jax.ShapeDtypeStruct((B, P), jnp.float32),
        grid_spec=pltpu.PrefetchScalarGridSpec(
            num_scalar_prefetch=0,
            grid=(nb,),
            in_specs=[
                pl.BlockSpec((tb, H), lambda i: (i, 0)),
                pl.BlockSpec((H, E * two_d), lambda i: (0, 0)),
                pl.BlockSpec((1, E * two_d), lambda i: (0, 0)),
            ],
            out_specs=pl.BlockSpec((tb, P), lambda i: (i, 0)),
        ),
        compiler_params=pltpu.CompilerParams(
            dimension_semantics=("parallel",)),
    )(x_c, w_c, b_fused)

    return dict(mean=slab[:, :D],
                aleatoric_var=slab[:, D:2 * D],
                epistemic_var=slab[:, 2 * D:3 * D])


# ----------------------------------------------------------------------------
# Classification path: mean softmax probabilities (padded lane-dense output)
# ----------------------------------------------------------------------------
def _classification_kernel(x_ref, w_ref, b_ref, out_ref,
                           *, n_models: int, n_classes: int, pad: int):
    logits_all = jnp.dot(x_ref[...], w_ref[...],
                         preferred_element_type=jnp.float32) + b_ref[...]

    acc = None
    for e in range(n_models):
        logits = logits_all[:, e * n_classes:(e + 1) * n_classes]
        z = logits - jnp.max(logits, axis=-1, keepdims=True)
        ez = jnp.exp(z)
        p = ez / jnp.sum(ez, axis=-1, keepdims=True)   # exact; keeps 1e-4 tolerance
        acc = p if acc is None else acc + p

    # Mean over E*mc identical-per-model samples == mean over E (mc cancels).
    probas = acc * (1.0 / float(n_models))
    if pad > 0:
        probas = jnp.concatenate(
            [probas, jnp.zeros((probas.shape[0], pad), jnp.float32)], axis=-1)
    out_ref[...] = probas


def classification_forward(x, w, b, *, monte_carlo_samples: int,
                           compute_dtype=jnp.float32):
    """x: [B, H]; w: [E, H, C]; b: [E, C] -> dict(probas=[B, C])."""
    del monte_carlo_samples  # cancels exactly in the mean (eval-mode models)
    B, H = x.shape
    E, _, C = w.shape

    w_fused = jnp.transpose(w, (1, 0, 2)).reshape(H, E * C)
    b_fused = b.reshape(1, E * C).astype(jnp.float32)
    x_c = x.astype(compute_dtype)
    w_c = w_fused.astype(compute_dtype)

    P = _round_up_lanes(C)
    tb = _pick_batch_tile(B)
    nb = B // tb

    kernel = functools.partial(_classification_kernel,
                               n_models=E, n_classes=C, pad=P - C)

    slab = pl.pallas_call(
        kernel,
        out_shape=jax.ShapeDtypeStruct((B, P), jnp.float32),
        grid_spec=pltpu.PrefetchScalarGridSpec(
            num_scalar_prefetch=0,
            grid=(nb,),
            in_specs=[
                pl.BlockSpec((tb, H), lambda i: (i, 0)),
                pl.BlockSpec((H, E * C), lambda i: (0, 0)),
                pl.BlockSpec((1, E * C), lambda i: (0, 0)),
            ],
            out_specs=pl.BlockSpec((tb, P), lambda i: (i, 0)),
        ),
        compiler_params=pltpu.CompilerParams(
            dimension_semantics=("parallel",)),
    )(x_c, w_c, b_fused)

    return dict(probas=slab[:, :C])


# ----------------------------------------------------------------------------
# Pure-JAX reference (mirrors the PyTorch loops) for a sanity check
# ----------------------------------------------------------------------------
def _regression_ref(x, w, b, mc):
    outs = jnp.einsum("bh,ehc->ebc", x, w) + b[:, None, :]
    D = w.shape[-1] // 2
    means = jnp.repeat(outs[..., :D], mc, axis=0)
    vars_ = jnp.repeat(jax.nn.softplus(outs[..., D:]), mc, axis=0)
    return dict(mean=means.mean(0),
                aleatoric_var=vars_.mean(0),
                epistemic_var=means.var(0, ddof=1))


def _classification_ref(x, w, b, mc):
    logits = jnp.einsum("bh,ehc->ebc", x, w) + b[:, None, :]
    probas = jnp.repeat(jax.nn.softmax(logits, axis=-1), mc, axis=0)
    return dict(probas=probas.mean(0))


if __name__ == "__main__":
    # TODO(synk): the host-side .detach().cpu() transfers have no in-kernel
    # equivalent; results simply stay as device arrays.
    key = jax.random.PRNGKey(0)
    B, H, D, C = 8, 32, 8, 16       # batch, features, regression dim, n classes
    E, MC = 3, 5                    # ensemble size, monte_carlo_samples

    k_x, k_wr, k_br, k_wc, k_bc = jax.random.split(key, 5)
    x = jax.random.normal(k_x, (B, H), dtype=jnp.float32)

    # deterministic "model" parameters (stacked linear heads)
    w_reg = 0.1 * jax.random.normal(k_wr, (E, H, 2 * D), dtype=jnp.float32)
    b_reg = 0.1 * jax.random.normal(k_br, (E, 2 * D), dtype=jnp.float32)
    w_cls = 0.1 * jax.random.normal(k_wc, (E, H, C), dtype=jnp.float32)
    b_cls = 0.1 * jax.random.normal(k_bc, (E, C), dtype=jnp.float32)

    reg_out = regression_forward(x, w_reg, b_reg, monte_carlo_samples=MC)
    cls_out = classification_forward(x, w_cls, b_cls, monte_carlo_samples=MC)
    jax.block_until_ready(reg_out)
    jax.block_until_ready(cls_out)

    reg_ref = _regression_ref(x, w_reg, b_reg, MC)
    cls_ref = _classification_ref(x, w_cls, b_cls, MC)
    for k in reg_out:
        assert jnp.allclose(reg_out[k], reg_ref[k], atol=1e-4), k
    assert jnp.allclose(cls_out["probas"], cls_ref["probas"], atol=1e-4)

    print("KERNEL_OK")
</pallas_src>

<mosaic_0001>
module attributes {stable_mosaic.version = 11 : i64} {
  func.func @_regression_kernel(%arg0: i32, %arg1: memref<8x32xf32, #tpu.memory_space<vmem>>, %arg2: memref<32x48xf32, #tpu.memory_space<vmem>>, %arg3: memref<1x48xf32, #tpu.memory_space<vmem>>, %arg4: memref<8x128xf32, #tpu.memory_space<vmem>>) attributes {dimension_semantics = [#tpu.dimension_semantics<parallel>], iteration_bounds = array<i64: 1>, scalar_prefetch = 0 : i64, scratch_operands = 0 : i64, tpu.core_type = #tpu.core_type<tc>, window_params = [{transform_indices = @transform_0, window_bounds = array<i64: 8, 32>}, {pipeline_mode = #tpu.pipeline_mode<synchronous>, transform_indices = @transform_1, window_bounds = array<i64: 32, 48>}, {pipeline_mode = #tpu.pipeline_mode<synchronous>, transform_indices = @transform_2, window_bounds = array<i64: 1, 48>}, {transform_indices = @transform_3, window_bounds = array<i64: 8, 128>}]} {
    %c0 = arith.constant 0 : index
    %c0_0 = arith.constant 0 : index
    %0 = vector.load %arg1[%c0, %c0_0] : memref<8x32xf32, #tpu.memory_space<vmem>>, vector<8x32xf32>
    %c0_1 = arith.constant 0 : index
    %c0_2 = arith.constant 0 : index
    %1 = vector.load %arg2[%c0_1, %c0_2] : memref<32x48xf32, #tpu.memory_space<vmem>>, vector<32x48xf32>
    %cst = arith.constant dense<0.000000e+00> : vector<8x48xf32>
    %2 = tpu.matmul %0, %1, %cst {dimension_numbers = #tpu.dot_dimension_numbers<[1], [0], [0], [1], [0, 0, 1, 1], [], []>} : vector<8x32xf32>, vector<32x48xf32>, vector<8x48xf32> -> vector<8x48xf32>
    %c0_3 = arith.constant 0 : index
    %c0_4 = arith.constant 0 : index
    %3 = vector.load %arg3[%c0_3, %c0_4] : memref<1x48xf32, #tpu.memory_space<vmem>>, vector<1x48xf32>
    %4 = vector.broadcast %3 : vector<1x48xf32> to vector<8x48xf32>
    %5 = arith.addf %2, %4 : vector<8x48xf32>
    %6 = vector.extract_strided_slice %5 {offsets = [0, 0], sizes = [8, 16], strides = [1, 1]} : vector<8x48xf32> to vector<8x16xf32>
    %7 = vector.extract_strided_slice %6 {offsets = [0, 0], sizes = [8, 8], strides = [1, 1]} : vector<8x16xf32> to vector<8x8xf32>
    %8 = vector.extract_strided_slice %6 {offsets = [0, 8], sizes = [8, 8], strides = [1, 1]} : vector<8x16xf32> to vector<8x8xf32>
    %cst_5 = arith.constant 0.000000e+00 : f32
    %9 = vector.broadcast %cst_5 : f32 to vector<8x8xf32>
    %10 = arith.maximumf %8, %9 : vector<8x8xf32>
    %11 = math.absf %8 : vector<8x8xf32>
    %cst_6 = arith.constant 0.000000e+00 : f32
    %12 = vector.broadcast %cst_6 : f32 to vector<8x8xf32>
    %13 = arith.subf %12, %11 : vector<8x8xf32>
    %14 = math.exp %13 : vector<8x8xf32>
    %15 = math.log1p %14 : vector<8x8xf32>
    %16 = arith.addf %10, %15 : vector<8x8xf32>
    %17 = vector.extract_strided_slice %5 {offsets = [0, 16], sizes = [8, 16], strides = [1, 1]} : vector<8x48xf32> to vector<8x16xf32>
    %18 = vector.extract_strided_slice %17 {offsets = [0, 0], sizes = [8, 8], strides = [1, 1]} : vector<8x16xf32> to vector<8x8xf32>
    %19 = vector.extract_strided_slice %17 {offsets = [0, 8], sizes = [8, 8], strides = [1, 1]} : vector<8x16xf32> to vector<8x8xf32>
    %cst_7 = arith.constant 0.000000e+00 : f32
    %20 = vector.broadcast %cst_7 : f32 to vector<8x8xf32>
    %21 = arith.maximumf %19, %20 : vector<8x8xf32>
    %22 = math.absf %19 : vector<8x8xf32>
    %cst_8 = arith.constant 0.000000e+00 : f32
    %23 = vector.broadcast %cst_8 : f32 to vector<8x8xf32>
    %24 = arith.subf %23, %22 : vector<8x8xf32>
    %25 = math.exp %24 : vector<8x8xf32>
    %26 = math.log1p %25 : vector<8x8xf32>
    %27 = arith.addf %21, %26 : vector<8x8xf32>
    %28 = arith.addf %7, %18 : vector<8x8xf32>
    %29 = arith.addf %16, %27 : vector<8x8xf32>
    %30 = vector.extract_strided_slice %5 {offsets = [0, 32], sizes = [8, 16], strides = [1, 1]} : vector<8x48xf32> to vector<8x16xf32>
    %31 = vector.extract_strided_slice %30 {offsets = [0, 0], sizes = [8, 8], strides = [1, 1]} : vector<8x16xf32> to vector<8x8xf32>
    %32 = vector.extract_strided_slice %30 {offsets = [0, 8], sizes = [8, 8], strides = [1, 1]} : vector<8x16xf32> to vector<8x8xf32>
    %cst_9 = arith.constant 0.000000e+00 : f32
    %33 = vector.broadcast %cst_9 : f32 to vector<8x8xf32>
    %34 = arith.maximumf %32, %33 : vector<8x8xf32>
    %35 = math.absf %32 : vector<8x8xf32>
    %cst_10 = arith.constant 0.000000e+00 : f32
    %36 = vector.broadcast %cst_10 : f32 to vector<8x8xf32>
    %37 = arith.subf %36, %35 : vector<8x8xf32>
    %38 = math.exp %37 : vector<8x8xf32>
    %39 = math.log1p %38 : vector<8x8xf32>
    %40 = arith.addf %34, %39 : vector<8x8xf32>
    %41 = arith.addf %28, %31 : vector<8x8xf32>
    %42 = arith.addf %29, %40 : vector<8x8xf32>
    %cst_11 = arith.constant 0.333333343 : f32
    %43 = vector.broadcast %cst_11 : f32 to vector<8x8xf32>
    %44 = arith.mulf %41, %43 : vector<8x8xf32>
    %cst_12 = arith.constant 0.333333343 : f32
    %45 = vector.broadcast %cst_12 : f32 to vector<8x8xf32>
    %46 = arith.mulf %42, %45 : vector<8x8xf32>
    %47 = arith.subf %7, %44 : vector<8x8xf32>
    %48 = arith.mulf %47, %47 : vector<8x8xf32>
    %49 = arith.subf %18, %44 : vector<8x8xf32>
    %50 = arith.mulf %49, %49 : vector<8x8xf32>
    %51 = arith.addf %48, %50 : vector<8x8xf32>
    %52 = arith.subf %31, %44 : vector<8x8xf32>
    %53 = arith.mulf %52, %52 : vector<8x8xf32>
    %54 = arith.addf %51, %53 : vector<8x8xf32>
    %cst_13 = arith.constant 0.357142866 : f32
    %55 = vector.broadcast %cst_13 : f32 to vector<8x8xf32>
    %56 = arith.mulf %54, %55 : vector<8x8xf32>
    %57 = tpu.concatenate %44, %46, %56 in 1 : vector<8x8xf32>, vector<8x8xf32>, vector<8x8xf32> -> vector<8x24xf32>
    %cst_14 = arith.constant 0.000000e+00 : f32
    %58 = vector.broadcast %cst_14 : f32 to vector<8x104xf32>
    %59 = tpu.concatenate %57, %58 in 1 : vector<8x24xf32>, vector<8x104xf32> -> vector<8x128xf32>
    %c0_15 = arith.constant 0 : index
    %c0_16 = arith.constant 0 : index
    %60 = vector.load %arg4[%c0_15, %c0_16] : memref<8x128xf32, #tpu.memory_space<vmem>>, vector<8x128xf32>
    tpu.vector_store %arg4[%c0_15, %c0_16], %59 {strides = array<i32>} : memref<8x128xf32, #tpu.memory_space<vmem>>, vector<8x128xf32>,
    return
  }
  func.func @transform_0(%arg0: i32) -> (i32, i32) {
    %c0_i32 = arith.constant 0 : i32
    %c0_i32_0 = arith.constant 0 : i32
    return %arg0, %c0_i32 : i32, i32
  }
  func.func @transform_1(%arg0: i32) -> (i32, i32) {
    %c0_i32 = arith.constant 0 : i32
    %c0_i32_0 = arith.constant 0 : i32
    %c0_i32_1 = arith.constant 0 : i32
    return %c0_i32, %c0_i32_0 : i32, i32
  }
  func.func @transform_2(%arg0: i32) -> (i32, i32) {
    %c0_i32 = arith.constant 0 : i32
    %c0_i32_0 = arith.constant 0 : i32
    %c0_i32_1 = arith.constant 0 : i32
    return %c0_i32, %c0_i32_0 : i32, i32
  }
  func.func @transform_3(%arg0: i32) -> (i32, i32) {
    %c0_i32 = arith.constant 0 : i32
    %c0_i32_0 = arith.constant 0 : i32
    return %arg0, %c0_i32 : i32, i32
  }
}

</mosaic_0001>

<llo_original>
// kernel: tpu_custom_call.1
$region0: #{tpu_custom_call.1}
  #allocation0 [shape = 'u32[]', space=smem, size = 0x4, offset = 0x4, fixed_abs, tag = 'smem constant byte address 0x4 - core index']
  #allocation1 [shape = 'u32[144,128]{1,0:T(1,128)}', space=vmem, size = 0x12000, scoped, tag = 'internal scratch']
  %s0 = inlined_call_operand.hbm [shape: f32[8,32], index: 0, kind: input, shape index: {}]
  %s1 = inlined_call_operand.hbm [shape: f32[32,48], index: 1, kind: input, shape index: {}]
  %s2 = inlined_call_operand.vmem [shape: f32[1,48], index: 2, kind: input, shape index: {}]
  %s3 = inlined_call_operand.hbm [shape: f32[8,128], index: 3, kind: output, shape index: {}]
  %s4 = sld [smem:[#allocation0]]
  $region30: #{tpu_custom_call.1} parent=0
    _
  %s6 = ssub.s32 1, %s4
  %s7 = scalar_select 0, %s6, %s4
  $region1: #{tpu_custom_call.1} parent=0
    #allocation2 [shape = 'u8[4096]{0}', space=vmem, size = 0x1000, scoped, tag = 'input window, operand 0, single buffered']
    #allocation3 [shape = 's32[1]{0}', space=sflag, size = 0x4, scoped, tag = 'scoped memory for tpu_custom_call.1']
    #allocation4 [shape = 's32[1]{0}', space=sflag, size = 0x4, scoped, tag = 'scoped memory for tpu_custom_call.1']
    #allocation5 [shape = 'u8[16384]{0}', space=vmem, size = 0x4000, scoped, tag = 'input window, operand 1, single buffered']
    #allocation6 [shape = 's32[1]{0}', space=sflag, size = 0x4, scoped, tag = 'scoped memory for tpu_custom_call.1']
    #allocation7 [shape = 'u8[4096]{0}', space=vmem, size = 0x1000, scoped, tag = 'output window, operand 0, single buffered']
    %8 = vsyncpa [#allocation3], 0
    %9 = vsyncpa [#allocation6], 0
    %10 = vsyncpa [#allocation4], 0
    // Predicated region
    $region2: #{tpu_custom_call.1} parent=1 // pred_check
      _
    $region3: #{tpu_custom_call.1} parent=1 // pred_check_branch
      %12 = sbr.rel (0) target = $region5
    $region4: #{tpu_custom_call.1} parent=1 // pred_region
      %s14 = ssub.s32 128, 128
      %15 = vsyncadd [#allocation3], %s14
      %s17 = sshll.u32 [#allocation2], 4
      %s18 = int_to_ptr.vmem [resolvable:$true] %s17
      %20 = dma.hbm_to_vmem [thread:$0]  %s0, 128, %s18, [#allocation3]
    $region5: #{tpu_custom_call.1} parent=1 // pred_fallthru
      _
    // Predicated region
    $region6: #{tpu_custom_call.1} parent=1 // pred_check
      _
    $region7: #{tpu_custom_call.1} parent=1 // pred_check_branch
      %22 = sbr.rel (0) target = $region9
    $region8: #{tpu_custom_call.1} parent=1 // pred_region
      %s24 = ssub.s32 512, 512
      %25 = vsyncadd [#allocation6], %s24
      %s26 = sshll.u32 [#allocation5], 4
      %s27 = int_to_ptr.vmem [resolvable:$true] %s26
      %32 = dma.hbm_to_vmem [thread:$0]  %s1, 512, %s27, [#allocation6], 128, 128, 8
    $region9: #{tpu_custom_call.1} parent=1 // pred_fallthru
      _
    // Predicated region
    $region10: #{tpu_custom_call.1} parent=1 // pred_check
      _
    $region11: #{tpu_custom_call.1} parent=1 // pred_check_branch
      %34 = sbr.rel (0) target = $region13
    $region12: #{tpu_custom_call.1} parent=1 // pred_region
      _
    $region13: #{tpu_custom_call.1} parent=1 // pred_fallthru
      _
    // Predicated region
    $region14: #{tpu_custom_call.1} parent=1 // pred_check
      _
    $region15: #{tpu_custom_call.1} parent=1 // pred_check_branch
      %36 = sbr.rel (0) target = $region17
    $region16: #{tpu_custom_call.1} parent=1 // pred_region
      %37 = dma.done [#allocation3], 128
    $region17: #{tpu_custom_call.1} parent=1 // pred_fallthru
      _
    // Predicated region
    $region18: #{tpu_custom_call.1} parent=1 // pred_check
      _
    $region19: #{tpu_custom_call.1} parent=1 // pred_check_branch
      %39 = sbr.rel (0) target = $region21
    $region20: #{tpu_custom_call.1} parent=1 // pred_region
      %40 = dma.done [#allocation6], 512
    $region21: #{tpu_custom_call.1} parent=1 // pred_fallthru
      _
    %v41 = vld [vmem:[#allocation2] sm:$0xff]
    %v42 = vld [vmem:[#allocation5] sm:$0xff]
    %v43 = vld [vmem:[#allocation5 + $0x8] sm:$0xff]
    %v44 = vld [vmem:[#allocation5 + $0x10] sm:$0xff]
    %v45 = vld [vmem:[#allocation5 + $0x18] sm:$0xff]
    %v46 = vld [vmem:[%s2] sm:$0x1]
    %v48 = vlaneseq
    %v49 = vshrl.u32 %v48, 7
    %v50 = vsub.s32 0, %v49
    %v51 = vrot.slane %v46, %v50
    %vm53 = vcmask 261120
    %v55 = vsel %vm53, %v41, 0
    %57 = vmatprep.subr.mxu0 0.0
    %58 = vmatpush1.msra.mxu0 0.0
    %59 = vmatprep.subr.mxu0 0.0
    %60 = vmatpush1.msra.mxu0 0.0
    %61 = vmatprep.subr.mxu0 0.0
    %62 = vmatpush1.msra.mxu0 0.0
    %63 = vmatprep.subr.mxu0 0.0
    %64 = vmatpush1.msra.mxu0 0.0
    %65 = vmatprep.subr.mxu0 0.0
    %66 = vmatpush1.msra.mxu0 0.0
    %67 = vmatprep.subr.mxu0 0.0
    %68 = vmatpush1.msra.mxu0 0.0
    %69 = vmatprep.subr.mxu0 0.0
    %70 = vmatpush1.msra.mxu0 0.0
    %71 = vmatprep.subr.mxu0 0.0
    %72 = vmatpush1.msra.mxu0 0.0
    %73 = vmatprep.subr.mxu0 0.0
    %74 = vmatpush1.msra.mxu0 0.0
    %75 = vmatprep.subr.mxu0 0.0
    %76 = vmatpush1.msra.mxu0 0.0
    %77 = vmatprep.subr.mxu0 0.0
    %78 = vmatpush1.msra.mxu0 0.0
    %79 = vmatprep.subr.mxu0 0.0
    %80 = vmatpush1.msra.mxu0 0.0
    %81 = vmatprep.subr.mxu0 0.0
    %82 = vmatpush1.msra.mxu0 %v45
    %83 = vmatprep.subr.mxu0 0.0
    %84 = vmatpush1.msra.mxu0 %v44
    %85 = vmatprep.subr.mxu0 0.0
    %86 = vmatpush1.msra.mxu0 %v43
    %87 = vmatprep.subr.mxu0 0.0
    %88 = vmatpush1.msra.mxu0 %v42
    %89 = vmatprep.subr.mxu0 0.0
    %90 = vmatpush2.msra.mxu0 0.0
    %91 = vmatprep.subr.mxu0 0.0
    %92 = vmatpush2.msra.mxu0 0.0
    %93 = vmatprep.subr.mxu0 0.0
    %94 = vmatpush2.msra.mxu0 0.0
    %95 = vmatprep.subr.mxu0 0.0
    %96 = vmatpush2.msra.mxu0 0.0
    %97 = vmatprep.subr.mxu0 0.0
    %98 = vmatpush2.msra.mxu0 0.0
    %99 = vmatprep.subr.mxu0 0.0
    %100 = vmatpush2.msra.mxu0 0.0
    %101 = vmatprep.subr.mxu0 0.0
    %102 = vmatpush2.msra.mxu0 0.0
    %103 = vmatprep.subr.mxu0 0.0
    %104 = vmatpush2.msra.mxu0 0.0
    %105 = vmatprep.subr.mxu0 0.0
    %106 = vmatpush2.msra.mxu0 0.0
    %107 = vmatprep.subr.mxu0 0.0
    %108 = vmatpush2.msra.mxu0 0.0
    %109 = vmatprep.subr.mxu0 0.0
    %110 = vmatpush2.msra.mxu0 0.0
    %111 = vmatprep.subr.mxu0 0.0
    %112 = vmatpush2.msra.mxu0 0.0
    %113 = vmatprep.subr.mxu0 0.0
    %114 = vmatpush2.msra.mxu0 0.0
    %115 = vmatprep.subr.mxu0 0.0
    %116 = vmatpush2.msra.mxu0 0.0
    %117 = vmatprep.subr.mxu0 0.0
    %118 = vmatpush2.msra.mxu0 0.0
    %119 = vmatprep.subr.mxu0 0.0
    %120 = vmatpush2.msra.mxu0 0.0
    %121 = vmatprep.mubr.f32.mxu0 0.0
    %122 = vmatmul.mubr.f32.gmra.mxu0 %v55
    %v123 = vpop.f32.mrf.mxu0
    %v124 = vadd.f32 %v51, %v123
    %v125 = vpop.f32.mrf.mxu0
    %126 = vdwg.mxu0
    %v127 = vmax.f32 %v124, 0.0
    %v128 = vand.u32 2147483647, %v124
    %v129 = vsub.f32 0.0, %v128
    %v130 = vmul.f32 %v129, 1.442695
    %v131 = vpow.pop %v130
    %v132 = vadd.f32 %v131, 1.0
    %v133 = vlog2.pop %v132
    %v134 = vmul.f32 %v133, 0.6931472
    %v135 = vmul.f32 -0.5, %v131
    %v136 = vadd.f32 %v135, 1.0
    %v137 = vmul.f32 %v136, %v131
    %v138 = vand.u32 2147483647, %v131
    %vm139 = vcmp.lt.f32.partialorder %v138, 0.0004427343
    %v140 = vsel %vm139, %v137, %v134
    %v141 = vadd.f32 %v127, %v140
    %143 = vrot.lane.b32.xlu0 %v124, 112
    %v144 = vpop.permute.xlu0 %143
    %v146 = vadd.f32 %v124, %v144
    %148 = vrot.lane.b32.xlu0 %v141, 112
    %v149 = vpop.permute.xlu0 %148
    %v151 = vadd.f32 %v141, %v149
    %152 = vrot.lane.b32.xlu0 %v124, 96
    %v153 = vpop.permute.xlu0 %152
    %v155 = vadd.f32 %v146, %v153
    %156 = vrot.lane.b32.xlu0 %v141, 96
    %v157 = vpop.permute.xlu0 %156
    %v159 = vadd.f32 %v151, %v157
    %v160 = vmul.f32 %v155, 0.33333334
    %v161 = vmul.f32 %v159, 0.33333334
    %v162 = vsub.f32 %v124, %v160
    %v163 = vmul.f32 %v162, %v162
    %165 = vrot.lane.b32.xlu0 %v160, 16
    %v166 = vpop.permute.xlu0 %165
    %v168 = vsub.f32 %v124, %v166
    %v169 = vmul.f32 %v168, %v168
    %171 = vrot.lane.b32.xlu0 %v169, 112
    %v172 = vpop.permute.xlu0 %171
    %v174 = vadd.f32 %v163, %v172
    %175 = vrot.lane.b32.xlu0 %v160, 32
    %v176 = vpop.permute.xlu0 %175
    %v178 = vsub.f32 %v124, %v176
    %v179 = vmul.f32 %v178, %v178
    %181 = vrot.lane.b32.xlu0 %v179, 96
    %v182 = vpop.permute.xlu0 %181
    %v184 = vadd.f32 %v174, %v182
    %v185 = vmul.f32 %v184, 0.35714287
    %187 = vrot.lane.b32.xlu0 %v185, 16
    %v188 = vpop.permute.xlu0 %187
    %vm190 = vcmask 64512
    %v191 = vsel %vm190, %v160, %v161
    %vm192 = vcmask 130048
    %v193 = vsel %vm192, %v191, %v188
    %vm194 = vcmask 195584
    %v195 = vsel %vm194, %v193, 0.0
    %196 = vst [vmem:[#allocation7] sm:$0xff] %v195
    // Predicated region
    $region22: #{tpu_custom_call.1} parent=1 // pred_check
      _
    $region23: #{tpu_custom_call.1} parent=1 // pred_check_branch
      %198 = sbr.rel (0) target = $region25
    $region24: #{tpu_custom_call.1} parent=1 // pred_region
      %s200 = ssub.s32 128, 128
      %201 = vsyncadd [#allocation4], %s200
      %s203 = sshll.u32 [#allocation7], 4
      %s204 = int_to_ptr.vmem [resolvable:$true] %s203
      %206 = dma.vmem_to_hbm [thread:$0]  %s204, 128, %s3, [#allocation4]
    $region25: #{tpu_custom_call.1} parent=1 // pred_fallthru
      _
    // Predicated region
    $region26: #{tpu_custom_call.1} parent=1 // pred_check
      _
    $region27: #{tpu_custom_call.1} parent=1 // pred_check_branch
      %208 = sbr.rel (0) target = $region29
    $region28: #{tpu_custom_call.1} parent=1 // pred_region
      %209 = dma.done [#allocation4], 128
    $region29: #{tpu_custom_call.1} parent=1 // pred_fallthru
      _
    %210 = vsyncpa [#allocation3], 1
    %211 = vsyncpa [#allocation6], 1
    %212 = vsyncpa [#allocation4], 1

</llo_original>
